<compile_context>
chip_gen: v7x
topology: tpu7x:2x2x1
jax: 0.10.0
libtpu: 0.0.40
codegen_flags: <defaults>
</compile_context>

<pallas_src>
import functools

import jax
import jax.numpy as jnp
from jax.experimental import pallas as pl
from jax.experimental.pallas import tpu as pltpu

LANES = 128  # TPU vreg lane width — pad the output feature dim to this.


def _mlp_kernel(x_ref, bits_ref, w1_ref, b1_ref, w2_ref, b2_ref, w3_ref, b3_ref,
                o_ref, *, matmul_dtype, training):
    x = x_ref[...]

    # ---- Linear 1 + SiLU (MXU, f32 accumulation) -------------------------
    h = jnp.dot(x.astype(matmul_dtype), w1_ref[...].astype(matmul_dtype),
                preferred_element_type=jnp.float32) + b1_ref[...]
    h = h * jax.nn.sigmoid(h)                      # SiLU (exp/recip -> EUP slot)

    # ---- Dropout(p=0.5), training-mode semantics --------------------------
    if training:
        # keep iff the top bit of the uniform uint32 is clear (P = 0.5):
        # pure integer compare, no int->float convert on the VALU slot.
        keep = bits_ref[...] < jnp.uint32(0x80000000)
        h = jnp.where(keep, h * 2.0, 0.0)          # scale by 1/(1-p)

    # ---- Linear 2 + SiLU ---------------------------------------------------
    h = jnp.dot(h.astype(matmul_dtype), w2_ref[...].astype(matmul_dtype),
                preferred_element_type=jnp.float32) + b2_ref[...]
    h = h * jax.nn.sigmoid(h)

    # ---- Linear 3 (zero-init in the reference module) + SiLU ---------------
    h = jnp.dot(h.astype(matmul_dtype), w3_ref[...].astype(matmul_dtype),
                preferred_element_type=jnp.float32) + b3_ref[...]
    o_ref[...] = (h * jax.nn.sigmoid(h)).astype(o_ref.dtype)


def my_mlp_forward(x, params, dropout_key, *, block_batch=512,
                   matmul_dtype=jnp.float32, training=True):
    """x: [batch, num_in] f32. params: dict w1,b1,w2,b2,w3,b3 stored as [in, out]
    (PyTorch weight.T). Returns [batch, num_out] f32."""
    w1, b1 = params["w1"], params["b1"]
    w2, b2 = params["w2"], params["b2"]
    w3, b3 = params["w3"], params["b3"]

    batch, num_in = x.shape
    d1 = w1.shape[1]            # num_intermittent
    d2 = w2.shape[1]            # num_intermittent // 2
    num_out = w3.shape[1]

    # Lane-dense output: pad the last layer's output dim up to a multiple of 128.
    n_pad = max(LANES, -(-num_out // LANES) * LANES)
    w3p = jnp.zeros((d2, n_pad), w3.dtype).at[:, :num_out].set(w3)
    b3p = jnp.zeros((1, n_pad), b3.dtype).at[:, :num_out].set(b3)

    # Optionally store matmul operands in bf16 (halves weight DMA / VMEM).
    if matmul_dtype != jnp.float32:
        w1 = w1.astype(matmul_dtype)
        w2 = w2.astype(matmul_dtype)
        w3p = w3p.astype(matmul_dtype)

    # Batch tiling: multiple of 8 sublanes; ~512 rows keeps the pipeline at the
    # HBM roofline while the whole working set (tiles + weights + f32 temps)
    # stays far under the 32 MiB scoped-VMEM default (v7x-safe: 64 MiB phys).
    tb = max(8, (min(block_batch, batch) // 8) * 8)
    padded_batch = -(-batch // tb) * tb
    if padded_batch != batch:
        x = jnp.pad(x, ((0, padded_batch - batch), (0, 0)))

    # Dropout randomness generated outside the kernel (one uint32 per h1 unit).
    bits = jax.random.bits(dropout_key, (padded_batch, d1), dtype=jnp.uint32)

    grid = (padded_batch // tb,)
    kernel = functools.partial(_mlp_kernel, matmul_dtype=matmul_dtype,
                               training=training)

    out = pl.pallas_call(
        kernel,
        out_shape=jax.ShapeDtypeStruct((padded_batch, n_pad), jnp.float32),
        grid=grid,
        in_specs=[
            pl.BlockSpec((tb, num_in), lambda i: (i, 0)),   # x tile
            pl.BlockSpec((tb, d1),     lambda i: (i, 0)),   # dropout bits tile
            pl.BlockSpec(w1.shape,     lambda i: (0, 0)),   # weights: VMEM-resident
            pl.BlockSpec(b1.shape,     lambda i: (0, 0)),
            pl.BlockSpec(w2.shape,     lambda i: (0, 0)),
            pl.BlockSpec(b2.shape,     lambda i: (0, 0)),
            pl.BlockSpec(w3p.shape,    lambda i: (0, 0)),
            pl.BlockSpec(b3p.shape,    lambda i: (0, 0)),
        ],
        out_specs=pl.BlockSpec((tb, n_pad), lambda i: (i, 0)),
        compiler_params=pltpu.CompilerParams(
            dimension_semantics=("parallel",),              # megacore on v7x
        ),
    )(x, bits, w1, b1, w2, b2, w3p, b3p)

    return out[:batch, :num_out]


def init_params(key, num_in, num_out, num_intermittent, *, zero_last=True):
    """Mirror nn.Linear default init; last layer zeroed like the torch module."""
    d1 = num_intermittent
    d2 = num_intermittent // 2
    k1, k2, k3, k4, k5, k6 = jax.random.split(key, 6)
    bound1 = 1.0 / jnp.sqrt(num_in)
    bound2 = 1.0 / jnp.sqrt(d1)
    bound3 = 1.0 / jnp.sqrt(d2)
    params = {
        # stored transposed relative to torch: [in, out]
        "w1": jax.random.uniform(k1, (num_in, d1), jnp.float32, -bound1, bound1),
        "b1": jax.random.uniform(k2, (1, d1), jnp.float32, -bound1, bound1),
        "w2": jax.random.uniform(k3, (d1, d2), jnp.float32, -bound2, bound2),
        "b2": jax.random.uniform(k4, (1, d2), jnp.float32, -bound2, bound2),
    }
    if zero_last:
        params["w3"] = jnp.zeros((d2, num_out), jnp.float32)
        params["b3"] = jnp.zeros((1, num_out), jnp.float32)
    else:
        params["w3"] = jax.random.uniform(k5, (d2, num_out), jnp.float32,
                                          -bound3, bound3)
        params["b3"] = jax.random.uniform(k6, (1, num_out), jnp.float32,
                                          -bound3, bound3)
    return params


def mlp_reference(x, params):
    """Pure-JAX eval-mode reference (no dropout)."""
    h = x @ params["w1"] + params["b1"]
    h = h * jax.nn.sigmoid(h)
    h = h @ params["w2"] + params["b2"]
    h = h * jax.nn.sigmoid(h)
    h = h @ params["w3"] + params["b3"]
    return h * jax.nn.sigmoid(h)


if __name__ == "__main__":
    # Small shapes consistent with the module's forward (x: [batch, num_in]).
    batch, num_in, num_intermittent, num_out = 64, 32, 64, 16

    key = jax.random.PRNGKey(0)
    k_x, k_p, k_p2, k_d = jax.random.split(key, 4)
    x = jax.random.normal(k_x, (batch, num_in), dtype=jnp.float32)

    # 1) Faithful module (zero-init last layer), training mode with dropout:
    #    output must be SiLU(0) == 0, exactly as in torch.
    params = init_params(k_p, num_in, num_out, num_intermittent, zero_last=True)
    out = my_mlp_forward(x, params, k_d, block_batch=32, training=True)
    out = jax.block_until_ready(out)
    assert out.shape == (batch, num_out), out.shape
    assert jnp.all(jnp.isfinite(out))
    assert jnp.allclose(out, 0.0)

    # 2) Non-degenerate last layer, eval mode (no dropout): compare against a
    #    pure-JAX reference to validate the fused kernel math + tiling.
    params2 = init_params(k_p2, num_in, num_out, num_intermittent, zero_last=False)
    out2 = jax.block_until_ready(
        my_mlp_forward(x, params2, k_d, block_batch=32, training=False))
    ref2 = mlp_reference(x, params2)
    assert jnp.allclose(out2, ref2, rtol=1e-5, atol=1e-5)

    # 3) bf16 matmul-input path (v6e/v7x native MXU rate), loose tolerance.
    out3 = jax.block_until_ready(
        my_mlp_forward(x, params2, k_d, block_batch=32, training=False,
                       matmul_dtype=jnp.bfloat16))
    assert out3.shape == (batch, num_out)
    assert jnp.all(jnp.isfinite(out3))
    assert jnp.allclose(out3, ref2, rtol=5e-2, atol=5e-2)

    print("KERNEL_OK")
</pallas_src>

<mosaic_0001>
module attributes {stable_mosaic.version = 11 : i64} {
  func.func @_mlp_kernel(%arg0: i32, %arg1: memref<32x32xf32, #tpu.memory_space<vmem>>, %arg2: memref<32x64xi32, #tpu.memory_space<vmem>>, %arg3: memref<32x64xf32, #tpu.memory_space<vmem>>, %arg4: memref<1x64xf32, #tpu.memory_space<vmem>>, %arg5: memref<64x32xf32, #tpu.memory_space<vmem>>, %arg6: memref<1x32xf32, #tpu.memory_space<vmem>>, %arg7: memref<32x128xf32, #tpu.memory_space<vmem>>, %arg8: memref<1x128xf32, #tpu.memory_space<vmem>>, %arg9: memref<32x128xf32, #tpu.memory_space<vmem>>) attributes {dimension_semantics = [#tpu.dimension_semantics<parallel>], iteration_bounds = array<i64: 2>, scalar_prefetch = 0 : i64, scratch_operands = 0 : i64, tpu.core_type = #tpu.core_type<tc>, window_params = [{transform_indices = @transform_0, window_bounds = array<i64: 32, 32>}, {transform_indices = @transform_1, window_bounds = array<i64: 32, 64>}, {pipeline_mode = #tpu.pipeline_mode<synchronous>, transform_indices = @transform_2, window_bounds = array<i64: 32, 64>}, {pipeline_mode = #tpu.pipeline_mode<synchronous>, transform_indices = @transform_3, window_bounds = array<i64: 1, 64>}, {pipeline_mode = #tpu.pipeline_mode<synchronous>, transform_indices = @transform_4, window_bounds = array<i64: 64, 32>}, {pipeline_mode = #tpu.pipeline_mode<synchronous>, transform_indices = @transform_5, window_bounds = array<i64: 1, 32>}, {pipeline_mode = #tpu.pipeline_mode<synchronous>, transform_indices = @transform_6, window_bounds = array<i64: 32, 128>}, {pipeline_mode = #tpu.pipeline_mode<synchronous>, transform_indices = @transform_7, window_bounds = array<i64: 1, 128>}, {transform_indices = @transform_8, window_bounds = array<i64: 32, 128>}]} {
    %c0 = arith.constant 0 : index
    %c0_0 = arith.constant 0 : index
    %0 = vector.load %arg1[%c0, %c0_0] : memref<32x32xf32, #tpu.memory_space<vmem>>, vector<32x32xf32>
    %c0_1 = arith.constant 0 : index
    %c0_2 = arith.constant 0 : index
    %1 = vector.load %arg3[%c0_1, %c0_2] : memref<32x64xf32, #tpu.memory_space<vmem>>, vector<32x64xf32>
    %cst = arith.constant dense<0.000000e+00> : vector<32x64xf32>
    %2 = tpu.matmul %0, %1, %cst {dimension_numbers = #tpu.dot_dimension_numbers<[1], [0], [0], [1], [0, 0, 1, 1], [], []>} : vector<32x32xf32>, vector<32x64xf32>, vector<32x64xf32> -> vector<32x64xf32>
    %c0_3 = arith.constant 0 : index
    %c0_4 = arith.constant 0 : index
    %3 = vector.load %arg4[%c0_3, %c0_4] : memref<1x64xf32, #tpu.memory_space<vmem>>, vector<1x64xf32>
    %4 = vector.broadcast %3 : vector<1x64xf32> to vector<32x64xf32>
    %5 = arith.addf %2, %4 : vector<32x64xf32>
    %6 = arith.negf %5 : vector<32x64xf32>
    %7 = math.exp %6 : vector<32x64xf32>
    %cst_5 = arith.constant 1.000000e+00 : f32
    %8 = vector.broadcast %cst_5 : f32 to vector<32x64xf32>
    %9 = arith.addf %8, %7 : vector<32x64xf32>
    %10 = arith.divf %8, %9 : vector<32x64xf32>
    %11 = arith.mulf %5, %10 : vector<32x64xf32>
    %c0_6 = arith.constant 0 : index
    %c0_7 = arith.constant 0 : index
    %12 = vector.load %arg2[%c0_6, %c0_7] : memref<32x64xi32, #tpu.memory_space<vmem>>, vector<32x64xi32>
    %c-2147483648_i32 = arith.constant -2147483648 : i32
    %13 = vector.broadcast %c-2147483648_i32 : i32 to vector<32x64xi32>
    %14 = arith.cmpi ult, %12, %13 : vector<32x64xi32>
    %cst_8 = arith.constant 2.000000e+00 : f32
    %15 = vector.broadcast %cst_8 : f32 to vector<32x64xf32>
    %16 = arith.mulf %11, %15 : vector<32x64xf32>
    %cst_9 = arith.constant 0.000000e+00 : f32
    %17 = vector.broadcast %cst_9 : f32 to vector<32x64xf32>
    %18 = arith.select %14, %16, %17 : vector<32x64xi1>, vector<32x64xf32>
    %c0_10 = arith.constant 0 : index
    %c0_11 = arith.constant 0 : index
    %19 = vector.load %arg5[%c0_10, %c0_11] : memref<64x32xf32, #tpu.memory_space<vmem>>, vector<64x32xf32>
    %cst_12 = arith.constant dense<0.000000e+00> : vector<32x32xf32>
    %20 = tpu.matmul %18, %19, %cst_12 {dimension_numbers = #tpu.dot_dimension_numbers<[1], [0], [0], [1], [0, 0, 1, 1], [], []>} : vector<32x64xf32>, vector<64x32xf32>, vector<32x32xf32> -> vector<32x32xf32>
    %c0_13 = arith.constant 0 : index
    %c0_14 = arith.constant 0 : index
    %21 = vector.load %arg6[%c0_13, %c0_14] : memref<1x32xf32, #tpu.memory_space<vmem>>, vector<1x32xf32>
    %22 = vector.broadcast %21 : vector<1x32xf32> to vector<32x32xf32>
    %23 = arith.addf %20, %22 : vector<32x32xf32>
    %24 = arith.negf %23 : vector<32x32xf32>
    %25 = math.exp %24 : vector<32x32xf32>
    %cst_15 = arith.constant 1.000000e+00 : f32
    %26 = vector.broadcast %cst_15 : f32 to vector<32x32xf32>
    %27 = arith.addf %26, %25 : vector<32x32xf32>
    %28 = arith.divf %26, %27 : vector<32x32xf32>
    %29 = arith.mulf %23, %28 : vector<32x32xf32>
    %c0_16 = arith.constant 0 : index
    %c0_17 = arith.constant 0 : index
    %30 = vector.load %arg7[%c0_16, %c0_17] : memref<32x128xf32, #tpu.memory_space<vmem>>, vector<32x128xf32>
    %cst_18 = arith.constant dense<0.000000e+00> : vector<32x128xf32>
    %31 = tpu.matmul %29, %30, %cst_18 {dimension_numbers = #tpu.dot_dimension_numbers<[1], [0], [0], [1], [0, 0, 1, 1], [], []>} : vector<32x32xf32>, vector<32x128xf32>, vector<32x128xf32> -> vector<32x128xf32>
    %c0_19 = arith.constant 0 : index
    %c0_20 = arith.constant 0 : index
    %32 = vector.load %arg8[%c0_19, %c0_20] : memref<1x128xf32, #tpu.memory_space<vmem>>, vector<1x128xf32>
    %33 = vector.broadcast %32 : vector<1x128xf32> to vector<32x128xf32>
    %34 = arith.addf %31, %33 : vector<32x128xf32>
    %35 = arith.negf %34 : vector<32x128xf32>
    %36 = math.exp %35 : vector<32x128xf32>
    %cst_21 = arith.constant 1.000000e+00 : f32
    %37 = vector.broadcast %cst_21 : f32 to vector<32x128xf32>
    %38 = arith.addf %37, %36 : vector<32x128xf32>
    %39 = arith.divf %37, %38 : vector<32x128xf32>
    %40 = arith.mulf %34, %39 : vector<32x128xf32>
    %c0_22 = arith.constant 0 : index
    %c0_23 = arith.constant 0 : index
    %41 = vector.load %arg9[%c0_22, %c0_23] : memref<32x128xf32, #tpu.memory_space<vmem>>, vector<32x128xf32>
    tpu.vector_store %arg9[%c0_22, %c0_23], %40 {strides = array<i32>} : memref<32x128xf32, #tpu.memory_space<vmem>>, vector<32x128xf32>,
    return
  }
  func.func @transform_0(%arg0: i32) -> (i32, i32) {
    %c0_i32 = arith.constant 0 : i32
    %c0_i32_0 = arith.constant 0 : i32
    return %arg0, %c0_i32 : i32, i32
  }
  func.func @transform_1(%arg0: i32) -> (i32, i32) {
    %c0_i32 = arith.constant 0 : i32
    %c0_i32_0 = arith.constant 0 : i32
    return %arg0, %c0_i32 : i32, i32
  }
  func.func @transform_2(%arg0: i32) -> (i32, i32) {
    %c0_i32 = arith.constant 0 : i32
    %c0_i32_0 = arith.constant 0 : i32
    %c0_i32_1 = arith.constant 0 : i32
    return %c0_i32, %c0_i32_0 : i32, i32
  }
  func.func @transform_3(%arg0: i32) -> (i32, i32) {
    %c0_i32 = arith.constant 0 : i32
    %c0_i32_0 = arith.constant 0 : i32
    %c0_i32_1 = arith.constant 0 : i32
    return %c0_i32, %c0_i32_0 : i32, i32
  }
  func.func @transform_4(%arg0: i32) -> (i32, i32) {
    %c0_i32 = arith.constant 0 : i32
    %c0_i32_0 = arith.constant 0 : i32
    %c0_i32_1 = arith.constant 0 : i32
    return %c0_i32, %c0_i32_0 : i32, i32
  }
  func.func @transform_5(%arg0: i32) -> (i32, i32) {
    %c0_i32 = arith.constant 0 : i32
    %c0_i32_0 = arith.constant 0 : i32
    %c0_i32_1 = arith.constant 0 : i32
    return %c0_i32, %c0_i32_0 : i32, i32
  }
  func.func @transform_6(%arg0: i32) -> (i32, i32) {
    %c0_i32 = arith.constant 0 : i32
    %c0_i32_0 = arith.constant 0 : i32
    %c0_i32_1 = arith.constant 0 : i32
    return %c0_i32, %c0_i32_0 : i32, i32
  }
  func.func @transform_7(%arg0: i32) -> (i32, i32) {
    %c0_i32 = arith.constant 0 : i32
    %c0_i32_0 = arith.constant 0 : i32
    %c0_i32_1 = arith.constant 0 : i32
    return %c0_i32, %c0_i32_0 : i32, i32
  }
  func.func @transform_8(%arg0: i32) -> (i32, i32) {
    %c0_i32 = arith.constant 0 : i32
    %c0_i32_0 = arith.constant 0 : i32
    return %arg0, %c0_i32 : i32, i32
  }
}

</mosaic_0001>

<llo_original>
// kernel: tpu_custom_call.1
$region0: #{tpu_custom_call.1}
  #allocation0 [shape = 'u32[]', space=smem, size = 0x4, offset = 0x4, fixed_abs, tag = 'smem constant byte address 0x4 - core index']
  #allocation1 [shape = 'u32[144,128]{1,0:T(1,128)}', space=vmem, size = 0x12000, scoped, tag = 'internal scratch']
  %s0 = inlined_call_operand.vmem [shape: f32[64,32], index: 0, kind: input, shape index: {}]
  %s1 = inlined_call_operand.vmem [shape: u32[64,64], index: 1, kind: input, shape index: {}]
  %s2 = inlined_call_operand.vmem [shape: f32[32,64], index: 2, kind: input, shape index: {}]
  %s3 = inlined_call_operand.vmem [shape: f32[1,64], index: 3, kind: input, shape index: {}]
  %s4 = inlined_call_operand.vmem [shape: f32[64,32], index: 4, kind: input, shape index: {}]
  %s5 = inlined_call_operand.vmem [shape: f32[1,32], index: 5, kind: input, shape index: {}]
  %s6 = inlined_call_operand.vmem [shape: f32[32,128], index: 6, kind: input, shape index: {}]
  %s7 = inlined_call_operand.vmem [shape: f32[1,128], index: 7, kind: input, shape index: {}]
  %s8 = inlined_call_operand.hbm [shape: f32[64,128], index: 8, kind: output, shape index: {}]
  %s9 = sld [smem:[#allocation0]]
  $region65: #{tpu_custom_call.1} parent=0
    _
  %s11 = ssub.s32 1, %s9
  %s12 = scalar_select 0, %s11, %s9
  $region1: #{tpu_custom_call.1} parent=0
    #allocation2 [shape = 'u8[32768]{0}', space=vmem, size = 0x8000, scoped, tag = 'output window, operand 0']
    #allocation3 [shape = 's32[2]{0}', space=sflag, size = 0x8, scoped, tag = 'scoped memory for tpu_custom_call.1']
    %13 = vsyncpa [#allocation3], 0
    %s14 = scalar_lea.sflag [#allocation3], 1
    %15 = vsyncpa %s14, 0
    loop: start=0, step=1, limit=4
    $region2: #{tpu_custom_call.1} parent=1 // loop_pre_header
      _
    $region3: #{tpu_custom_call.1} parent=1 // loop_header
      %s17 = sphi 0, %s21
      %p18 = scmp.ge.s32.totalorder %s17, 4
      %s27 = sphi 0, %s29
      %s30 = sphi 0, %s27
      %s31 = sphi 0, %s30
      %s47 = sphi 0, %s31
      %s53 = sphi 0, %s55
      %s56 = sphi 0, %s53
      %s57 = sphi 0, %s56
      %s73 = sphi 0, %s57
      %s77 = sphi 0, %s77
      %s79 = sphi 0, %s77
      %s80 = sphi 0, %s79
      %s94 = sphi 0, %s80
      %s98 = sphi 0, %s98
      %s100 = sphi 0, %s98
      %s101 = sphi 0, %s100
      %s115 = sphi 0, %s101
      %s119 = sphi 0, %s119
      %s121 = sphi 0, %s119
      %s122 = sphi 0, %s121
      %s136 = sphi 0, %s122
      %s140 = sphi 0, %s140
      %s142 = sphi 0, %s140
      %s143 = sphi 0, %s142
      %s157 = sphi 0, %s143
      %s161 = sphi 0, %s161
      %s163 = sphi 0, %s161
      %s164 = sphi 0, %s163
      %s178 = sphi 0, %s164
      %s182 = sphi 0, %s182
      %s184 = sphi 0, %s182
      %s185 = sphi 0, %s184
      %s199 = sphi 0, %s185
      %s205 = sphi 0, %s207
      %s208 = sphi 0, %s205
      %s209 = sphi 0, %s208
      %s225 = sphi 0, %s209
    $region4: #{tpu_custom_call.1} parent=1 // loop_header_branch
      %20 = sbr.rel (%p18) target = $region8
    $region5: #{tpu_custom_call.1} parent=1 // loop_body
      %s22 = ssub.s32 %s17, 1
      %s23 = ssub.s32 %s17, 2
      %s24 = sadd.s32 %s17, 1
      %s25 = ssub.s32 %s17, %s24
      %p26 = scmp.eq.s32.totalorder %s25, 0
      %s28 = sadd.s32 %s27, 1
      %s29 = scalar_select %p26, %s27, %s28
      %p32 = pneg %p26
      %p33 = scmp.eq.s32.totalorder %s17, 1
      %p34 = por %p32, %p33
      %p35 = scmp.ne.s32.totalorder %s27, %s30
      %p36 = scmp.eq.s32.totalorder %s17, 0
      %p37 = por %p35, %p36
      %p38 = scmp.ne.s32.totalorder %s27, %s30
      %p39 = scmp.eq.s32.totalorder %s22, 1
      %p40 = por %p38, %p39
      %p41 = scmp.ne.s32.totalorder %s30, %s31
      %p42 = scmp.eq.s32.totalorder %s22, 0
      %p43 = por %p41, %p42
      %p44 = scmp.ne.s32.totalorder %s30, %s31
      %p45 = scmp.eq.s32.totalorder %s23, 1
      %p46 = por %p44, %p45
      %p48 = scmp.ne.s32.totalorder %s31, %s47
      %p49 = scmp.eq.s32.totalorder %s23, 0
      %p50 = por %p48, %p49
      %s51 = ssub.s32 %s17, %s24
      %p52 = scmp.eq.s32.totalorder %s51, 0
      %s54 = sadd.s32 %s53, 1
      %s55 = scalar_select %p52, %s53, %s54
      %p58 = pneg %p52
      %p59 = scmp.eq.s32.totalorder %s17, 1
      %p60 = por %p58, %p59
      %p61 = scmp.ne.s32.totalorder %s53, %s56
      %p62 = scmp.eq.s32.totalorder %s17, 0
      %p63 = por %p61, %p62
      %p64 = scmp.ne.s32.totalorder %s53, %s56
      %p65 = scmp.eq.s32.totalorder %s22, 1
      %p66 = por %p64, %p65
      %p67 = scmp.ne.s32.totalorder %s56, %s57
      %p68 = scmp.eq.s32.totalorder %s22, 0
      %p69 = por %p67, %p68
      %p70 = scmp.ne.s32.totalorder %s56, %s57
      %p71 = scmp.eq.s32.totalorder %s23, 1
      %p72 = por %p70, %p71
      %p74 = scmp.ne.s32.totalorder %s57, %s73
      %p75 = scmp.eq.s32.totalorder %s23, 0
      %p76 = por %p74, %p75
      %s78 = sadd.s32 %s77, 1
      %p81 = scmp.eq.s32.totalorder %s17, 1
      %p82 = scmp.ne.s32.totalorder %s77, %s79
      %p83 = scmp.eq.s32.totalorder %s17, 0
      %p84 = por %p82, %p83
      %p85 = scmp.ne.s32.totalorder %s77, %s79
      %p86 = scmp.eq.s32.totalorder %s22, 1
      %p87 = por %p85, %p86
      %p88 = scmp.ne.s32.totalorder %s79, %s80
      %p89 = scmp.eq.s32.totalorder %s22, 0
      %p90 = por %p88, %p89
      %p91 = scmp.ne.s32.totalorder %s79, %s80
      %p92 = scmp.eq.s32.totalorder %s23, 1
      %p93 = por %p91, %p92
      %p95 = scmp.ne.s32.totalorder %s80, %s94
      %p96 = scmp.eq.s32.totalorder %s23, 0
      %p97 = por %p95, %p96
      %s99 = sadd.s32 %s98, 1
      %p102 = scmp.eq.s32.totalorder %s17, 1
      %p103 = scmp.ne.s32.totalorder %s98, %s100
      %p104 = scmp.eq.s32.totalorder %s17, 0
      %p105 = por %p103, %p104
      %p106 = scmp.ne.s32.totalorder %s98, %s100
      %p107 = scmp.eq.s32.totalorder %s22, 1
      %p108 = por %p106, %p107
      %p109 = scmp.ne.s32.totalorder %s100, %s101
      %p110 = scmp.eq.s32.totalorder %s22, 0
      %p111 = por %p109, %p110
      %p112 = scmp.ne.s32.totalorder %s100, %s101
      %p113 = scmp.eq.s32.totalorder %s23, 1
      %p114 = por %p112, %p113
      %p116 = scmp.ne.s32.totalorder %s101, %s115
      %p117 = scmp.eq.s32.totalorder %s23, 0
      %p118 = por %p116, %p117
      %s120 = sadd.s32 %s119, 1
      %p123 = scmp.eq.s32.totalorder %s17, 1
      %p124 = scmp.ne.s32.totalorder %s119, %s121
      %p125 = scmp.eq.s32.totalorder %s17, 0
      %p126 = por %p124, %p125
      %p127 = scmp.ne.s32.totalorder %s119, %s121
      %p128 = scmp.eq.s32.totalorder %s22, 1
      %p129 = por %p127, %p128
      %p130 = scmp.ne.s32.totalorder %s121, %s122
      %p131 = scmp.eq.s32.totalorder %s22, 0
      %p132 = por %p130, %p131
      %p133 = scmp.ne.s32.totalorder %s121, %s122
      %p134 = scmp.eq.s32.totalorder %s23, 1
      %p135 = por %p133, %p134
      %p137 = scmp.ne.s32.totalorder %s122, %s136
      %p138 = scmp.eq.s32.totalorder %s23, 0
      %p139 = por %p137, %p138
      %s141 = sadd.s32 %s140, 1
      %p144 = scmp.eq.s32.totalorder %s17, 1
      %p145 = scmp.ne.s32.totalorder %s140, %s142
      %p146 = scmp.eq.s32.totalorder %s17, 0
      %p147 = por %p145, %p146
      %p148 = scmp.ne.s32.totalorder %s140, %s142
      %p149 = scmp.eq.s32.totalorder %s22, 1
      %p150 = por %p148, %p149
      %p151 = scmp.ne.s32.totalorder %s142, %s143
      %p152 = scmp.eq.s32.totalorder %s22, 0
      %p153 = por %p151, %p152
      %p154 = scmp.ne.s32.totalorder %s142, %s143
      %p155 = scmp.eq.s32.totalorder %s23, 1
      %p156 = por %p154, %p155
      %p158 = scmp.ne.s32.totalorder %s143, %s157
      %p159 = scmp.eq.s32.totalorder %s23, 0
      %p160 = por %p158, %p159
      %s162 = sadd.s32 %s161, 1
      %p165 = scmp.eq.s32.totalorder %s17, 1
      %p166 = scmp.ne.s32.totalorder %s161, %s163
      %p167 = scmp.eq.s32.totalorder %s17, 0
      %p168 = por %p166, %p167
      %p169 = scmp.ne.s32.totalorder %s161, %s163
      %p170 = scmp.eq.s32.totalorder %s22, 1
      %p171 = por %p169, %p170
      %p172 = scmp.ne.s32.totalorder %s163, %s164
      %p173 = scmp.eq.s32.totalorder %s22, 0
      %p174 = por %p172, %p173
      %p175 = scmp.ne.s32.totalorder %s163, %s164
      %p176 = scmp.eq.s32.totalorder %s23, 1
      %p177 = por %p175, %p176
      %p179 = scmp.ne.s32.totalorder %s164, %s178
      %p180 = scmp.eq.s32.totalorder %s23, 0
      %p181 = por %p179, %p180
      %s183 = sadd.s32 %s182, 1
      %p186 = scmp.eq.s32.totalorder %s17, 1
      %p187 = scmp.ne.s32.totalorder %s182, %s184
      %p188 = scmp.eq.s32.totalorder %s17, 0
      %p189 = por %p187, %p188
      %p190 = scmp.ne.s32.totalorder %s182, %s184
      %p191 = scmp.eq.s32.totalorder %s22, 1
      %p192 = por %p190, %p191
      %p193 = scmp.ne.s32.totalorder %s184, %s185
      %p194 = scmp.eq.s32.totalorder %s22, 0
      %p195 = por %p193, %p194
      %p196 = scmp.ne.s32.totalorder %s184, %s185
      %p197 = scmp.eq.s32.totalorder %s23, 1
      %p198 = por %p196, %p197
      %p200 = scmp.ne.s32.totalorder %s185, %s199
      %p201 = scmp.eq.s32.totalorder %s23, 0
      %p202 = por %p200, %p201
      %s203 = ssub.s32 %s17, %s24
      %p204 = scmp.eq.s32.totalorder %s203, 0
      %s206 = sadd.s32 %s205, 1
      %s207 = scalar_select %p204, %s205, %s206
      %p210 = pneg %p204
      %p211 = scmp.eq.s32.totalorder %s17, 1
      %p212 = por %p210, %p211
      %p213 = scmp.ne.s32.totalorder %s205, %s208
      %p214 = scmp.eq.s32.totalorder %s17, 0
      %p215 = por %p213, %p214
      %p216 = scmp.ne.s32.totalorder %s205, %s208
      %p217 = scmp.eq.s32.totalorder %s22, 1
      %p218 = por %p216, %p217
      %p219 = scmp.ne.s32.totalorder %s208, %s209
      %p220 = scmp.eq.s32.totalorder %s22, 0
      %p221 = por %p219, %p220
      %p222 = scmp.ne.s32.totalorder %s208, %s209
      %p223 = scmp.eq.s32.totalorder %s23, 1
      %p224 = por %p222, %p223
      %p226 = scmp.ne.s32.totalorder %s209, %s225
      %p227 = scmp.eq.s32.totalorder %s23, 0
      %p228 = por %p226, %p227
      %p229 = scmp.le.s32.totalorder 1, %s17
      %p230 = scmp.lt.s32.totalorder %s17, 3
      %p231 = pnand %p229, %p230
      %p232 = pneg %p231
      // Predicated region
      $region9: #{tpu_custom_call.1} parent=5 // pred_check
        _
      $region10: #{tpu_custom_call.1} parent=5 // pred_check_branch
        %234 = sbr.rel (%p231) target = $region12
      $region11: #{tpu_custom_call.1} parent=5 // pred_region
        %s235 = ssub.s32 %s17, 1
        // Predicated region
        $region13: #{tpu_custom_call.1} parent=11 // pred_check
          %p236 = pneg %p90
        $region14: #{tpu_custom_call.1} parent=11 // pred_check_branch
          %238 = sbr.rel (%p236) target = $region16
        $region15: #{tpu_custom_call.1} parent=11 // pred_region
          _
        $region16: #{tpu_custom_call.1} parent=11 // pred_fallthru
          _
        // Predicated region
        $region17: #{tpu_custom_call.1} parent=11 // pred_check
          %p239 = pneg %p111
        $region18: #{tpu_custom_call.1} parent=11 // pred_check_branch
          %241 = sbr.rel (%p239) target = $region20
        $region19: #{tpu_custom_call.1} parent=11 // pred_region
          _
        $region20: #{tpu_custom_call.1} parent=11 // pred_fallthru
          _
        // Predicated region
        $region21: #{tpu_custom_call.1} parent=11 // pred_check
          %p242 = pneg %p132
        $region22: #{tpu_custom_call.1} parent=11 // pred_check_branch
          %244 = sbr.rel (%p242) target = $region24
        $region23: #{tpu_custom_call.1} parent=11 // pred_region
          _
        $region24: #{tpu_custom_call.1} parent=11 // pred_fallthru
          _
        // Predicated region
        $region25: #{tpu_custom_call.1} parent=11 // pred_check
          %p245 = pneg %p153
        $region26: #{tpu_custom_call.1} parent=11 // pred_check_branch
          %247 = sbr.rel (%p245) target = $region28
        $region27: #{tpu_custom_call.1} parent=11 // pred_region
          _
        $region28: #{tpu_custom_call.1} parent=11 // pred_fallthru
          _
        // Predicated region
        $region29: #{tpu_custom_call.1} parent=11 // pred_check
          %p248 = pneg %p174
        $region30: #{tpu_custom_call.1} parent=11 // pred_check_branch
          %250 = sbr.rel (%p248) target = $region32
        $region31: #{tpu_custom_call.1} parent=11 // pred_region
          _
        $region32: #{tpu_custom_call.1} parent=11 // pred_fallthru
          _
        // Predicated region
        $region33: #{tpu_custom_call.1} parent=11 // pred_check
          %p251 = pneg %p195
        $region34: #{tpu_custom_call.1} parent=11 // pred_check_branch
          %253 = sbr.rel (%p251) target = $region36
        $region35: #{tpu_custom_call.1} parent=11 // pred_region
          _
        $region36: #{tpu_custom_call.1} parent=11 // pred_fallthru
          _
      $region12: #{tpu_custom_call.1} parent=5 // pred_fallthru
        _
      %p254 = scmp.lt.s32.totalorder %s17, 2
      // Predicated region
      $region37: #{tpu_custom_call.1} parent=5 // pred_check
        %p255 = pneg %p254
      $region38: #{tpu_custom_call.1} parent=5 // pred_check_branch
        %257 = sbr.rel (%p255) target = $region40
      $region39: #{tpu_custom_call.1} parent=5 // pred_region
        // Predicated region
        $region41: #{tpu_custom_call.1} parent=39 // pred_check
          %p258 = pneg %p37
        $region42: #{tpu_custom_call.1} parent=39 // pred_check_branch
          %260 = sbr.rel (%p258) target = $region44
        $region43: #{tpu_custom_call.1} parent=39 // pred_region
          %s261 = smul.u32 4, %s17
          %p262 = scmp.lt.s32.totalorder %s261, 7
          %s263 = scalar_select %p262, %s261, 7
          %s264 = smul.addr %s263, 8
          %s265 = scalar_lea.vmem %s0, %s264
          %s266 = smul.u32 4, %s17
        $region44: #{tpu_custom_call.1} parent=39 // pred_fallthru
          _
        // Predicated region
        $region45: #{tpu_custom_call.1} parent=39 // pred_check
          %p267 = pneg %p63
        $region46: #{tpu_custom_call.1} parent=39 // pred_check_branch
          %269 = sbr.rel (%p267) target = $region48
        $region47: #{tpu_custom_call.1} parent=39 // pred_region
          %s270 = smul.u32 4, %s17
          %p271 = scmp.lt.s32.totalorder %s270, 7
          %s272 = scalar_select %p271, %s270, 7
          %s273 = smul.addr %s272, 8
          %s274 = scalar_lea.vmem %s1, %s273
          %s275 = smul.u32 4, %s17
        $region48: #{tpu_custom_call.1} parent=39 // pred_fallthru
          _
      $region40: #{tpu_custom_call.1} parent=5 // pred_fallthru
        _
      %p276 = scmp.le.s32.totalorder 1, %s17
      %p277 = scmp.lt.s32.totalorder %s17, 3
      %p278 = pnand %p276, %p277
      %p279 = pneg %p278
      // Predicated region
      $region49: #{tpu_custom_call.1} parent=5 // pred_check
        _
      $region50: #{tpu_custom_call.1} parent=5 // pred_check_branch
        %281 = sbr.rel (%p278) target = $region52
      $region51: #{tpu_custom_call.1} parent=5 // pred_region
        %s282 = ssub.s32 %s17, 1
        %s283 = smul.u32 4, %s22
        %p284 = scmp.lt.s32.totalorder %s283, 7
        %s285 = scalar_select %p284, %s283, 7
        %s286 = smul.addr %s285, 8
        %s287 = scalar_lea.vmem %s0, %s286
        %p288 = pneg %p43
        %p289 = pneg %p40
        %s290 = smul.u32 4, %s22
        %p291 = scmp.lt.s32.totalorder %s290, 7
        %s292 = scalar_select %p291, %s290, 7
        %s293 = smul.addr %s292, 8
        %s294 = scalar_lea.vmem %s1, %s293
        %p295 = pneg %p69
        %p296 = pneg %p66
        %p297 = pneg %p90
        %p298 = pneg %p87
        %p299 = pneg %p111
        %p300 = pneg %p108
        %p301 = pneg %p132
        %p302 = pneg %p129
        %p303 = pneg %p153
        %p304 = pneg %p150
        %p305 = pneg %p174
        %p306 = pneg %p171
        %p307 = pneg %p195
        %p308 = pneg %p192
        %p309 = pneg %p221
        %p310 = pneg %p218
        %s311 = sand.u32 %s208, 1
        %s312 = scalar_lea.sflag [#allocation3], %s311
        %s313 = sand.u32 %s208, 1
        %s314 = smul.addr %s313, 32
        %s315 = scalar_lea.vmem [#allocation2], %s314
        %s316 = smul.u32 4, %s22
        %p317 = scmp.lt.s32.totalorder %s316, 7
        %s318 = scalar_select %p317, %s316, 7
        %s319 = smul.addr %s318, 8
        %s320 = scalar_lea.vmem %s0, %s319
        %s321 = smul.u32 4, %s22
        %s322 = smul.u32 4, %s22
        %p323 = scmp.lt.s32.totalorder %s322, 7
        %s324 = scalar_select %p323, %s322, 7
        %s325 = smul.addr %s324, 8
        %s326 = scalar_lea.vmem %s1, %s325
        %s327 = smul.u32 4, %s22
        %s328 = smul.u32 4, %s22
        %v329 = vld [vmem:[%s320] sm:$0xff]
        %v330 = vld [vmem:[%s320 + $0x8] sm:$0xff]
        %v331 = vld [vmem:[%s320 + $0x10] sm:$0xff]
        %v332 = vld [vmem:[%s320 + $0x18] sm:$0xff]
        %v333 = vld [vmem:[%s2] sm:$0xff]
        %v334 = vld [vmem:[%s2 + $0x8] sm:$0xff]
        %v335 = vld [vmem:[%s2 + $0x10] sm:$0xff]
        %v336 = vld [vmem:[%s2 + $0x18] sm:$0xff]
        %v337 = vld [vmem:[%s3] sm:$0x1]
        %v339 = vlaneseq
        %v340 = vshrl.u32 %v339, 7
        %v341 = vsub.s32 0, %v340
        %v342 = vrot.slane %v337, %v341
        %vm344 = vcmask 261120
        %v346 = vsel %vm344, %v329, 0
        %v349 = vsel %vm344, %v330, 0
        %v352 = vsel %vm344, %v331, 0
        %v355 = vsel %vm344, %v332, 0
        %357 = vmatprep.subr.mxu0 0.0
        %358 = vmatpush1.msra.mxu0 %v333
        %359 = vmatprep.subr.mxu0 0.0
        %360 = vmatpush1.msra.mxu0 %v334
        %361 = vmatprep.subr.mxu0 0.0
        %362 = vmatpush1.msra.mxu0 %v335
        %363 = vmatprep.subr.mxu0 0.0
        %364 = vmatpush1.msra.mxu0 %v336
        %365 = vmatprep.subr.mxu0 0.0
        %366 = vmatpush1.msra.mxu0 0.0
        %367 = vmatprep.subr.mxu0 0.0
        %368 = vmatpush1.msra.mxu0 0.0
        %369 = vmatprep.subr.mxu0 0.0
        %370 = vmatpush1.msra.mxu0 0.0
        %371 = vmatprep.subr.mxu0 0.0
        %372 = vmatpush1.msra.mxu0 0.0
        %373 = vmatprep.subr.mxu0 0.0
        %374 = vmatpush1.msra.mxu0 0.0
        %375 = vmatprep.subr.mxu0 0.0
        %376 = vmatpush1.msra.mxu0 0.0
        %377 = vmatprep.subr.mxu0 0.0
        %378 = vmatpush1.msra.mxu0 0.0
        %379 = vmatprep.subr.mxu0 0.0
        %380 = vmatpush1.msra.mxu0 0.0
        %381 = vmatprep.subr.mxu0 0.0
        %382 = vmatpush1.msra.mxu0 0.0
        %383 = vmatprep.subr.mxu0 0.0
        %384 = vmatpush1.msra.mxu0 0.0
        %385 = vmatprep.subr.mxu0 0.0
        %386 = vmatpush1.msra.mxu0 0.0
        %387 = vmatprep.subr.mxu0 0.0
        %388 = vmatpush1.msra.mxu0 0.0
        %389 = vmatprep.subr.mxu0 0.0
        %390 = vmatpush1.msra.mxu0 0.0
        %391 = vmatprep.subr.mxu0 0.0
        %392 = vmatpush1.msra.mxu0 0.0
        %393 = vmatprep.subr.mxu0 0.0
        %394 = vmatpush1.msra.mxu0 0.0
        %395 = vmatprep.subr.mxu0 0.0
        %396 = vmatpush1.msra.mxu0 0.0
        %397 = vmatprep.subr.mxu0 0.0
        %398 = vmatpush1.msra.mxu0 0.0
        %399 = vmatprep.subr.mxu0 0.0
        %400 = vmatpush1.msra.mxu0 0.0
        %401 = vmatprep.subr.mxu0 0.0
        %402 = vmatpush1.msra.mxu0 0.0
        %403 = vmatprep.subr.mxu0 0.0
        %404 = vmatpush1.msra.mxu0 0.0
        %405 = vmatprep.subr.mxu0 0.0
        %406 = vmatpush1.msra.mxu0 0.0
        %407 = vmatprep.subr.mxu0 0.0
        %408 = vmatpush1.msra.mxu0 0.0
        %409 = vmatprep.subr.mxu0 0.0
        %410 = vmatpush1.msra.mxu0 0.0
        %411 = vmatprep.subr.mxu0 0.0
        %412 = vmatpush1.msra.mxu0 0.0
        %413 = vmatprep.subr.mxu0 0.0
        %414 = vmatpush1.msra.mxu0 0.0
        %415 = vmatprep.subr.mxu0 0.0
        %416 = vmatpush1.msra.mxu0 0.0
        %417 = vmatprep.subr.mxu0 0.0
        %418 = vmatpush1.msra.mxu0 0.0
        %419 = vmatprep.subr.mxu0 0.0
        %420 = vmatpush1.msra.mxu0 0.0
        %421 = vmatprep.mubr.f32.mxu0 0.0
        %422 = vmatmul.mubr.f32.gmra.mrb[0].mxu0 %v346
        %v423 = vpop.f32.mrb[0].mxu0
        %v424 = vadd.f32 %v342, %v423
        %v425 = vpop.f32.mrb[0].mxu0
        %426 = vmatprep.mubr.f32.mxu0 0.0
        %427 = vmatmul.mubr.f32.gmra.mrb[0].mxu0 %v349
        %v428 = vpop.f32.mrb[0].mxu0
        %v429 = vadd.f32 %v342, %v428
        %v430 = vpop.f32.mrb[0].mxu0
        %431 = vmatprep.mubr.f32.mxu0 0.0
        %432 = vmatmul.mubr.f32.gmra.mrb[0].mxu0 %v352
        %v433 = vpop.f32.mrb[0].mxu0
        %v434 = vadd.f32 %v342, %v433
        %v435 = vpop.f32.mrb[0].mxu0
        %436 = vmatprep.mubr.f32.mxu0 0.0
        %437 = vmatmul.mubr.f32.gmra.mrb[0].mxu0 %v355
        %v438 = vpop.f32.mrb[0].mxu0
        %v439 = vadd.f32 %v342, %v438
        %v440 = vpop.f32.mrb[0].mxu0
        %441 = vdwg.mxu0
        %v442 = vxor.u32 %v424, 2147483648
        %v443 = vxor.u32 %v429, 2147483648
        %v444 = vxor.u32 %v434, 2147483648
        %v445 = vxor.u32 %v439, 2147483648
        %v446 = vmul.f32 %v442, 1.442695
        %v447 = vpow.pop %v446
        %v448 = vmul.f32 %v443, 1.442695
        %v449 = vpow.pop %v448
        %v450 = vmul.f32 %v444, 1.442695
        %v451 = vpow.pop %v450
        %v452 = vmul.f32 %v445, 1.442695
        %v453 = vpow.pop %v452
        %v454 = vadd.f32 %v447, 1.0
        %v455 = vadd.f32 %v449, 1.0
        %v456 = vadd.f32 %v451, 1.0
        %v457 = vadd.f32 %v453, 1.0
        %v458 = vrcp.pop %v454
        %v459 = vmul.f32 1.0, %v458
        %v460 = vrcp.pop %v455
        %v461 = vmul.f32 1.0, %v460
        %v462 = vrcp.pop %v456
        %v463 = vmul.f32 1.0, %v462
        %v464 = vrcp.pop %v457
        %v465 = vmul.f32 1.0, %v464
        %v466 = vmul.f32 %v424, %v459
        %v467 = vmul.f32 %v429, %v461
        %v468 = vmul.f32 %v434, %v463
        %v469 = vmul.f32 %v439, %v465
        %v470 = vld [vmem:[%s326] sm:$0xff]
        %v471 = vld [vmem:[%s326 + $0x8] sm:$0xff]
        %v472 = vld [vmem:[%s326 + $0x10] sm:$0xff]
        %v473 = vld [vmem:[%s326 + $0x18] sm:$0xff]
        %vm474 = vcmp.lt.u32.totalorder %v470, 2147483648
        %vm475 = vcmp.lt.u32.totalorder %v471, 2147483648
        %vm476 = vcmp.lt.u32.totalorder %v472, 2147483648
        %vm477 = vcmp.lt.u32.totalorder %v473, 2147483648
        %v478 = vmul.f32 %v466, 2.0
        %v479 = vmul.f32 %v467, 2.0
        %v480 = vmul.f32 %v468, 2.0
        %v481 = vmul.f32 %v469, 2.0
        %v482 = vsel %vm474, %v478, 0.0
        %v483 = vsel %vm475, %v479, 0.0
        %v484 = vsel %vm476, %v480, 0.0
        %v485 = vsel %vm477, %v481, 0.0
        %v486 = vld [vmem:[%s4] sm:$0xff]
        %v487 = vld [vmem:[%s4 + $0x8] sm:$0xff]
        %v488 = vld [vmem:[%s4 + $0x10] sm:$0xff]
        %v489 = vld [vmem:[%s4 + $0x18] sm:$0xff]
        %v490 = vld [vmem:[%s4 + $0x20] sm:$0xff]
        %v491 = vld [vmem:[%s4 + $0x28] sm:$0xff]
        %v492 = vld [vmem:[%s4 + $0x30] sm:$0xff]
        %v493 = vld [vmem:[%s4 + $0x38] sm:$0xff]
        %v494 = vld [vmem:[%s5] sm:$0x1]
        %v496 = vlaneseq
        %v497 = vshrl.u32 %v496, 7
        %v498 = vsub.s32 0, %v497
        %v499 = vrot.slane %v494, %v498
        %vm501 = vcmask 523264
        %v503 = vsel %vm501, %v482, 0
        %v506 = vsel %vm501, %v483, 0
        %v509 = vsel %vm501, %v484, 0
        %v512 = vsel %vm501, %v485, 0
        %514 = vmatprep.subr.mxu0 0.0
        %515 = vmatpush1.msra.mxu0 %v486
        %516 = vmatprep.subr.mxu0 0.0
        %517 = vmatpush1.msra.mxu0 %v487
        %518 = vmatprep.subr.mxu0 0.0
        %519 = vmatpush1.msra.mxu0 %v488
        %520 = vmatprep.subr.mxu0 0.0
        %521 = vmatpush1.msra.mxu0 %v489
        %522 = vmatprep.subr.mxu0 0.0
        %523 = vmatpush1.msra.mxu0 %v490
        %524 = vmatprep.subr.mxu0 0.0
        %525 = vmatpush1.msra.mxu0 %v491
        %526 = vmatprep.subr.mxu0 0.0
        %527 = vmatpush1.msra.mxu0 %v492
        %528 = vmatprep.subr.mxu0 0.0
        %529 = vmatpush1.msra.mxu0 %v493
        %530 = vmatprep.subr.mxu0 0.0
        %531 = vmatpush1.msra.mxu0 0.0
        %532 = vmatprep.subr.mxu0 0.0
        %533 = vmatpush1.msra.mxu0 0.0
        %534 = vmatprep.subr.mxu0 0.0
        %535 = vmatpush1.msra.mxu0 0.0
        %536 = vmatprep.subr.mxu0 0.0
        %537 = vmatpush1.msra.mxu0 0.0
        %538 = vmatprep.subr.mxu0 0.0
        %539 = vmatpush1.msra.mxu0 0.0
        %540 = vmatprep.subr.mxu0 0.0
        %541 = vmatpush1.msra.mxu0 0.0
        %542 = vmatprep.subr.mxu0 0.0
        %543 = vmatpush1.msra.mxu0 0.0
        %544 = vmatprep.subr.mxu0 0.0
        %545 = vmatpush1.msra.mxu0 0.0
        %546 = vmatprep.subr.mxu0 0.0
        %547 = vmatpush1.msra.mxu0 0.0
        %548 = vmatprep.subr.mxu0 0.0
        %549 = vmatpush1.msra.mxu0 0.0
        %550 = vmatprep.subr.mxu0 0.0
        %551 = vmatpush1.msra.mxu0 0.0
        %552 = vmatprep.subr.mxu0 0.0
        %553 = vmatpush1.msra.mxu0 0.0
        %554 = vmatprep.subr.mxu0 0.0
        %555 = vmatpush1.msra.mxu0 0.0
        %556 = vmatprep.subr.mxu0 0.0
        %557 = vmatpush1.msra.mxu0 0.0
        %558 = vmatprep.subr.mxu0 0.0
        %559 = vmatpush1.msra.mxu0 0.0
        %560 = vmatprep.subr.mxu0 0.0
        %561 = vmatpush1.msra.mxu0 0.0
        %562 = vmatprep.subr.mxu0 0.0
        %563 = vmatpush1.msra.mxu0 0.0
        %564 = vmatprep.subr.mxu0 0.0
        %565 = vmatpush1.msra.mxu0 0.0
        %566 = vmatprep.subr.mxu0 0.0
        %567 = vmatpush1.msra.mxu0 0.0
        %568 = vmatprep.subr.mxu0 0.0
        %569 = vmatpush1.msra.mxu0 0.0
        %570 = vmatprep.subr.mxu0 0.0
        %571 = vmatpush1.msra.mxu0 0.0
        %572 = vmatprep.subr.mxu0 0.0
        %573 = vmatpush1.msra.mxu0 0.0
        %574 = vmatprep.subr.mxu0 0.0
        %575 = vmatpush1.msra.mxu0 0.0
        %576 = vmatprep.subr.mxu0 0.0
        %577 = vmatpush1.msra.mxu0 0.0
        %578 = vmatprep.mubr.f32.mxu0 0.0
        %579 = vmatmul.mubr.f32.gmra.mrb[0].mxu0 %v503
        %v580 = vpop.f32.mrb[0].mxu0
        %v581 = vadd.f32 %v499, %v580
        %v582 = vpop.f32.mrb[0].mxu0
        %583 = vmatprep.mubr.f32.mxu0 0.0
        %584 = vmatmul.mubr.f32.gmra.mrb[0].mxu0 %v506
        %v585 = vpop.f32.mrb[0].mxu0
        %v586 = vadd.f32 %v499, %v585
        %v587 = vpop.f32.mrb[0].mxu0
        %588 = vmatprep.mubr.f32.mxu0 0.0
        %589 = vmatmul.mubr.f32.gmra.mrb[0].mxu0 %v509
        %v590 = vpop.f32.mrb[0].mxu0
        %v591 = vadd.f32 %v499, %v590
        %v592 = vpop.f32.mrb[0].mxu0
        %593 = vmatprep.mubr.f32.mxu0 0.0
        %594 = vmatmul.mubr.f32.gmra.mrb[0].mxu0 %v512
        %v595 = vpop.f32.mrb[0].mxu0
        %v596 = vadd.f32 %v499, %v595
        %v597 = vpop.f32.mrb[0].mxu0
        %598 = vdwg.mxu0
        %v599 = vxor.u32 %v581, 2147483648
        %v600 = vxor.u32 %v586, 2147483648
        %v601 = vxor.u32 %v591, 2147483648
        %v602 = vxor.u32 %v596, 2147483648
        %v603 = vmul.f32 %v599, 1.442695
        %v604 = vpow.pop %v603
        %v605 = vmul.f32 %v600, 1.442695
        %v606 = vpow.pop %v605
        %v607 = vmul.f32 %v601, 1.442695
        %v608 = vpow.pop %v607
        %v609 = vmul.f32 %v602, 1.442695
        %v610 = vpow.pop %v609
        %v611 = vadd.f32 %v604, 1.0
        %v612 = vadd.f32 %v606, 1.0
        %v613 = vadd.f32 %v608, 1.0
        %v614 = vadd.f32 %v610, 1.0
        %v615 = vrcp.pop %v611
        %v616 = vmul.f32 1.0, %v615
        %v617 = vrcp.pop %v612
        %v618 = vmul.f32 1.0, %v617
        %v619 = vrcp.pop %v613
        %v620 = vmul.f32 1.0, %v619
        %v621 = vrcp.pop %v614
        %v622 = vmul.f32 1.0, %v621
        %v623 = vmul.f32 %v581, %v616
        %v624 = vmul.f32 %v586, %v618
        %v625 = vmul.f32 %v591, %v620
        %v626 = vmul.f32 %v596, %v622
        %v627 = vld [vmem:[%s6] sm:$0xff]
        %v628 = vld [vmem:[%s6 + $0x8] sm:$0xff]
        %v629 = vld [vmem:[%s6 + $0x10] sm:$0xff]
        %v630 = vld [vmem:[%s6 + $0x18] sm:$0xff]
        %v631 = vld [vmem:[%s7] sm:$0x1]
        %v633 = vlaneseq
        %v634 = vshrl.u32 %v633, 7
        %v635 = vsub.s32 0, %v634
        %v636 = vrot.slane %v631, %v635
        %v639 = vsel %vm344, %v623, 0
        %v642 = vsel %vm344, %v624, 0
        %v645 = vsel %vm344, %v625, 0
        %v648 = vsel %vm344, %v626, 0
        %650 = vmatprep.subr.mxu0 0.0
        %651 = vmatpush1.msra.mxu0 %v627
        %652 = vmatprep.subr.mxu0 0.0
        %653 = vmatpush1.msra.mxu0 %v628
        %654 = vmatprep.subr.mxu0 0.0
        %655 = vmatpush1.msra.mxu0 %v629
        %656 = vmatprep.subr.mxu0 0.0
        %657 = vmatpush1.msra.mxu0 %v630
        %658 = vmatprep.subr.mxu0 0.0
        %659 = vmatpush1.msra.mxu0 0.0
        %660 = vmatprep.subr.mxu0 0.0
        %661 = vmatpush1.msra.mxu0 0.0
        %662 = vmatprep.subr.mxu0 0.0
        %663 = vmatpush1.msra.mxu0 0.0
        %664 = vmatprep.subr.mxu0 0.0
        %665 = vmatpush1.msra.mxu0 0.0
        %666 = vmatprep.subr.mxu0 0.0
        %667 = vmatpush1.msra.mxu0 0.0
        %668 = vmatprep.subr.mxu0 0.0
        %669 = vmatpush1.msra.mxu0 0.0
        %670 = vmatprep.subr.mxu0 0.0
        %671 = vmatpush1.msra.mxu0 0.0
        %672 = vmatprep.subr.mxu0 0.0
        %673 = vmatpush1.msra.mxu0 0.0
        %674 = vmatprep.subr.mxu0 0.0
        %675 = vmatpush1.msra.mxu0 0.0
        %676 = vmatprep.subr.mxu0 0.0
        %677 = vmatpush1.msra.mxu0 0.0
        %678 = vmatprep.subr.mxu0 0.0
        %679 = vmatpush1.msra.mxu0 0.0
        %680 = vmatprep.subr.mxu0 0.0
        %681 = vmatpush1.msra.mxu0 0.0
        %682 = vmatprep.subr.mxu0 0.0
        %683 = vmatpush1.msra.mxu0 0.0
        %684 = vmatprep.subr.mxu0 0.0
        %685 = vmatpush1.msra.mxu0 0.0
        %686 = vmatprep.subr.mxu0 0.0
        %687 = vmatpush1.msra.mxu0 0.0
        %688 = vmatprep.subr.mxu0 0.0
        %689 = vmatpush1.msra.mxu0 0.0
        %690 = vmatprep.subr.mxu0 0.0
        %691 = vmatpush1.msra.mxu0 0.0
        %692 = vmatprep.subr.mxu0 0.0
        %693 = vmatpush1.msra.mxu0 0.0
        %694 = vmatprep.subr.mxu0 0.0
        %695 = vmatpush1.msra.mxu0 0.0
        %696 = vmatprep.subr.mxu0 0.0
        %697 = vmatpush1.msra.mxu0 0.0
        %698 = vmatprep.subr.mxu0 0.0
        %699 = vmatpush1.msra.mxu0 0.0
        %700 = vmatprep.subr.mxu0 0.0
        %701 = vmatpush1.msra.mxu0 0.0
        %702 = vmatprep.subr.mxu0 0.0
        %703 = vmatpush1.msra.mxu0 0.0
        %704 = vmatprep.subr.mxu0 0.0
        %705 = vmatpush1.msra.mxu0 0.0
        %706 = vmatprep.subr.mxu0 0.0
        %707 = vmatpush1.msra.mxu0 0.0
        %708 = vmatprep.subr.mxu0 0.0
        %709 = vmatpush1.msra.mxu0 0.0
        %710 = vmatprep.subr.mxu0 0.0
        %711 = vmatpush1.msra.mxu0 0.0
        %712 = vmatprep.subr.mxu0 0.0
        %713 = vmatpush1.msra.mxu0 0.0
        %714 = vmatprep.mubr.f32.mxu0 0.0
        %715 = vmatmul.mubr.f32.gmra.mrb[0].mxu0 %v639
        %v716 = vpop.f32.mrb[0].mxu0
        %v717 = vadd.f32 %v636, %v716
        %v718 = vpop.f32.mrb[0].mxu0
        %719 = vmatprep.mubr.f32.mxu0 0.0
        %720 = vmatmul.mubr.f32.gmra.mrb[0].mxu0 %v642
        %v721 = vpop.f32.mrb[0].mxu0
        %v722 = vadd.f32 %v636, %v721
        %v723 = vpop.f32.mrb[0].mxu0
        %724 = vmatprep.mubr.f32.mxu0 0.0
        %725 = vmatmul.mubr.f32.gmra.mrb[0].mxu0 %v645
        %v726 = vpop.f32.mrb[0].mxu0
        %v727 = vadd.f32 %v636, %v726
        %v728 = vpop.f32.mrb[0].mxu0
        %729 = vmatprep.mubr.f32.mxu0 0.0
        %730 = vmatmul.mubr.f32.gmra.mrb[0].mxu0 %v648
        %v731 = vpop.f32.mrb[0].mxu0
        %v732 = vadd.f32 %v636, %v731
        %v733 = vpop.f32.mrb[0].mxu0
        %734 = vdwg.mxu0
        %v735 = vxor.u32 %v717, 2147483648
        %v736 = vxor.u32 %v722, 2147483648
        %v737 = vxor.u32 %v727, 2147483648
        %v738 = vxor.u32 %v732, 2147483648
        %v739 = vmul.f32 %v735, 1.442695
        %v740 = vpow.pop %v739
        %v741 = vmul.f32 %v736, 1.442695
        %v742 = vpow.pop %v741
        %v743 = vmul.f32 %v737, 1.442695
        %v744 = vpow.pop %v743
        %v745 = vmul.f32 %v738, 1.442695
        %v746 = vpow.pop %v745
        %v747 = vadd.f32 %v740, 1.0
        %v748 = vadd.f32 %v742, 1.0
        %v749 = vadd.f32 %v744, 1.0
        %v750 = vadd.f32 %v746, 1.0
        %v751 = vrcp.pop %v747
        %v752 = vmul.f32 1.0, %v751
        %v753 = vrcp.pop %v748
        %v754 = vmul.f32 1.0, %v753
        %v755 = vrcp.pop %v749
        %v756 = vmul.f32 1.0, %v755
        %v757 = vrcp.pop %v750
        %v758 = vmul.f32 1.0, %v757
        %v759 = vmul.f32 %v717, %v752
        %v760 = vmul.f32 %v722, %v754
        %v761 = vmul.f32 %v727, %v756
        %v762 = vmul.f32 %v732, %v758
        %763 = vst [vmem:[%s315] sm:$0xff] %v759
        %764 = vst [vmem:[%s315 + $0x8] sm:$0xff] %v760
        %765 = vst [vmem:[%s315 + $0x10] sm:$0xff] %v761
        %766 = vst [vmem:[%s315 + $0x18] sm:$0xff] %v762
        %s767 = sand.u32 %s208, 1
        %s768 = scalar_lea.sflag [#allocation3], %s767
        %s769 = sand.u32 %s208, 1
        %s770 = smul.addr %s769, 32
        %s771 = scalar_lea.vmem [#allocation2], %s770
        // Predicated region
        $region53: #{tpu_custom_call.1} parent=51 // pred_check
          %p772 = pneg %p218
        $region54: #{tpu_custom_call.1} parent=51 // pred_check_branch
          %774 = sbr.rel (%p772) target = $region56
        $region55: #{tpu_custom_call.1} parent=51 // pred_region
          %s775 = smul.u32 4, %s22
          %s777 = ssub.s32 512, 512
          %778 = vsyncadd %s768, %s777
          %s779 = smul.addr %s775, 128
          %s780 = scalar_lea.hbm %s8, %s779
          %s781 = sshll.u32 %s771, 4
          %s782 = int_to_ptr.vmem [resolvable:$true] %s781
          %787 = dma.vmem_to_hbm [thread:$0]  %s782, 512, %s780, %s768, 128, 128, 8
        $region56: #{tpu_custom_call.1} parent=51 // pred_fallthru
          _
      $region52: #{tpu_custom_call.1} parent=5 // pred_fallthru
        _
      %p788 = scmp.le.s32.totalorder 2, %s17
      // Predicated region
      $region57: #{tpu_custom_call.1} parent=5 // pred_check
        %p789 = pneg %p788
      $region58: #{tpu_custom_call.1} parent=5 // pred_check_branch
        %791 = sbr.rel (%p789) target = $region60
      $region59: #{tpu_custom_call.1} parent=5 // pred_region
        %s792 = ssub.s32 %s17, 2
        // Predicated region
        $region61: #{tpu_custom_call.1} parent=59 // pred_check
          %p793 = pneg %p224
        $region62: #{tpu_custom_call.1} parent=59 // pred_check_branch
          %795 = sbr.rel (%p793) target = $region64
        $region63: #{tpu_custom_call.1} parent=59 // pred_region
          %s796 = sand.u32 %s209, 1
          %s797 = scalar_lea.sflag [#allocation3], %s796
          %s798 = sand.u32 %s209, 1
          %s799 = smul.addr %s798, 32
          %s800 = scalar_lea.vmem [#allocation2], %s799
          %801 = dma.done %s797, 512
        $region64: #{tpu_custom_call.1} parent=59 // pred_fallthru
          _
      $region60: #{tpu_custom_call.1} parent=5 // pred_fallthru
        _
    $region6: #{tpu_custom_call.1} parent=1 // loop_footer
      %s21 = sadd.s32 1, %s17
    $region7: #{tpu_custom_call.1} parent=1 // loop_footer_branch
      %16 = sbr.rel target = $region3
    $region8: #{tpu_custom_call.1} parent=1 // loop_exit
      _
    %802 = vsyncpa [#allocation3], 1
    %s803 = scalar_lea.sflag [#allocation3], 1
    %804 = vsyncpa %s803, 1

</llo_original>
